<compile_context>
chip_gen: v5e
topology: v5e:2x2
jax: 0.10.0
libtpu: 0.0.40
codegen_flags: <defaults>
</compile_context>

<pallas_src>
import jax
import jax.numpy as jnp
from jax.experimental import pallas as pl
from jax.experimental.pallas import tpu as pltpu

_LANE = 128      # lane width of a vreg
_SUBLANE = 8     # sublane count of a vreg


def _logreg_kernel(w_ref, b_ref, x_ref, o_ref):
    # w_ref: SMEM (2,) f32, b_ref: SMEM (1,) f32
    # x_ref: VMEM (2, TR, 128) f32  (feature-major, batch dense on sublanes x lanes)
    # o_ref: VMEM (TR, 128) f32
    w0 = w_ref[0]
    w1 = w_ref[1]
    bias = b_ref[0]
    # Linear layer as VPU FMAs over full (TR, 128) slabs (no MXU for 2x1).
    z = w0 * x_ref[0] + w1 * x_ref[1] + bias
    # sigmoid(z) = 0.5 * (tanh(z/2) + 1): single EUP op, exact, overflow-free.
    o_ref[...] = 0.5 * (jnp.tanh(0.5 * z) + 1.0)


def logistic_regression(x, w, b, *, block_rows=2048):
    """x: (B, 2) f32, w: (1, 2) f32, b: (1,) f32 -> (B, 1) f32."""
    B, F = x.shape
    O, Fw = w.shape
    assert F == 2 and Fw == F and b.shape == (O,) and O == 1

    # Feature-major, fully dense layout: (2, R, 128).  Only the tail is padded
    # (at most 127 elements); the (2, B_pad) -> (2, R, 128) reshape is free.
    R = pl.cdiv(B, _LANE)
    b_pad = R * _LANE
    xt = x.T.astype(jnp.float32)                        # (2, B)
    if b_pad != B:
        xt = jnp.pad(xt, ((0, 0), (0, b_pad - B)))      # pad cols -> sigmoid(b), sliced off
    xt = xt.reshape(F, R, _LANE)                        # (2, R, 128)

    # Row tile: multiple of 8 sublanes (or the whole R when small).  The last
    # grid block may be partial; Pallas masks its writeback.
    if R <= block_rows:
        tr = R
    else:
        tr = max(_SUBLANE, (block_rows // _SUBLANE) * _SUBLANE)
    grid = (pl.cdiv(R, tr),)

    out = pl.pallas_call(
        _logreg_kernel,
        out_shape=jax.ShapeDtypeStruct((R, _LANE), jnp.float32),
        grid=grid,
        in_specs=[
            pl.BlockSpec(memory_space=pltpu.MemorySpace.SMEM),   # w  (2,)  scalars
            pl.BlockSpec(memory_space=pltpu.MemorySpace.SMEM),   # b  (1,)  scalar
            pl.BlockSpec((F, tr, _LANE), lambda i: (0, i, 0)),   # x feature-major tile
        ],
        out_specs=pl.BlockSpec((tr, _LANE), lambda i: (i, 0)),   # dense (rows,128) output
        compiler_params=pltpu.CompilerParams(
            dimension_semantics=("parallel",),   # v7x: shard batch across 2 TCs
        ),
        cost_estimate=pl.CostEstimate(
            flops=5 * b_pad,            # 2 mul + 2 add + epilogue mul/add per element
            transcendentals=b_pad,      # one tanh per element
            bytes_accessed=12 * b_pad,  # 8 B in + 4 B out per batch element
        ),
    )(w.reshape(F).astype(jnp.float32), b.astype(jnp.float32), xt)

    return out.reshape(b_pad)[:B].reshape(B, O)


if __name__ == "__main__":
    key = jax.random.PRNGKey(0)
    kx, kw, kb = jax.random.split(key, 3)

    # Small shapes consistent with the module: Linear(2, 1)
    batch = 8
    in_features = 2
    out_features = 1

    x = jax.random.normal(kx, (batch, in_features), dtype=jnp.float32)

    # PyTorch-style Linear init: U(-1/sqrt(in), 1/sqrt(in))
    bound = 1.0 / jnp.sqrt(jnp.float32(in_features))
    w = jax.random.uniform(kw, (out_features, in_features),
                           minval=-bound, maxval=bound, dtype=jnp.float32)
    b = jax.random.uniform(kb, (out_features,),
                           minval=-bound, maxval=bound, dtype=jnp.float32)

    out = jax.block_until_ready(logistic_regression(x, w, b))

    # Sanity check against plain JAX reference (tanh-based sigmoid is exact).
    ref = jax.nn.sigmoid(x @ w.T + b)
    assert out.shape == (batch, out_features)
    assert jnp.max(jnp.abs(out - ref)) < 1e-5, "mismatch vs reference"

    print("KERNEL_OK")
</pallas_src>

<mosaic_0001>
module attributes {stable_mosaic.version = 11 : i64} {
  func.func @_logreg_kernel(%arg0: i32, %arg1: memref<2xf32, #tpu.memory_space<smem>>, %arg2: memref<1xf32, #tpu.memory_space<smem>>, %arg3: memref<2x1x128xf32, #tpu.memory_space<vmem>>, %arg4: memref<1x128xf32, #tpu.memory_space<vmem>>) attributes {dimension_semantics = [#tpu.dimension_semantics<parallel>], iteration_bounds = array<i64: 1>, scalar_prefetch = 0 : i64, scratch_operands = 0 : i64, tpu.core_type = #tpu.core_type<tc>, window_params = [{transform_indices = @transform_0, window_bounds = array<i64: 2>}, {transform_indices = @transform_1, window_bounds = array<i64: 1>}, {transform_indices = @transform_2, window_bounds = array<i64: 2, 1, 128>}, {transform_indices = @transform_3, window_bounds = array<i64: 1, 128>}]} {
    %c0 = arith.constant 0 : index
    %0 = memref.load %arg1[%c0] : memref<2xf32, #tpu.memory_space<smem>>
    %c1 = arith.constant 1 : index
    %1 = memref.load %arg1[%c1] : memref<2xf32, #tpu.memory_space<smem>>
    %c0_0 = arith.constant 0 : index
    %2 = memref.load %arg2[%c0_0] : memref<1xf32, #tpu.memory_space<smem>>
    %c0_1 = arith.constant 0 : index
    %c0_2 = arith.constant 0 : index
    %c0_3 = arith.constant 0 : index
    %3 = vector.load %arg3[%c0_1, %c0_2, %c0_3] : memref<2x1x128xf32, #tpu.memory_space<vmem>>, vector<1x1x128xf32>
    %4 = vector.shape_cast %3 : vector<1x1x128xf32> to vector<1x128xf32>
    %5 = vector.broadcast %0 : f32 to vector<1x128xf32>
    %6 = arith.mulf %5, %4 : vector<1x128xf32>
    %c1_4 = arith.constant 1 : index
    %c0_5 = arith.constant 0 : index
    %c0_6 = arith.constant 0 : index
    %7 = vector.load %arg3[%c1_4, %c0_5, %c0_6] : memref<2x1x128xf32, #tpu.memory_space<vmem>>, vector<1x1x128xf32>
    %8 = vector.shape_cast %7 : vector<1x1x128xf32> to vector<1x128xf32>
    %9 = vector.broadcast %1 : f32 to vector<1x128xf32>
    %10 = arith.mulf %9, %8 : vector<1x128xf32>
    %11 = arith.addf %6, %10 : vector<1x128xf32>
    %12 = vector.broadcast %2 : f32 to vector<1x128xf32>
    %13 = arith.addf %11, %12 : vector<1x128xf32>
    %cst = arith.constant 5.000000e-01 : f32
    %14 = vector.broadcast %cst : f32 to vector<1x128xf32>
    %15 = arith.mulf %14, %13 : vector<1x128xf32>
    %16 = math.tanh %15 : vector<1x128xf32>
    %cst_7 = arith.constant 1.000000e+00 : f32
    %17 = vector.broadcast %cst_7 : f32 to vector<1x128xf32>
    %18 = arith.addf %16, %17 : vector<1x128xf32>
    %cst_8 = arith.constant 5.000000e-01 : f32
    %19 = vector.broadcast %cst_8 : f32 to vector<1x128xf32>
    %20 = arith.mulf %19, %18 : vector<1x128xf32>
    %c0_9 = arith.constant 0 : index
    %c0_10 = arith.constant 0 : index
    %21 = vector.load %arg4[%c0_9, %c0_10] : memref<1x128xf32, #tpu.memory_space<vmem>>, vector<1x128xf32>
    tpu.vector_store %arg4[%c0_9, %c0_10], %20 {strides = array<i32>} : memref<1x128xf32, #tpu.memory_space<vmem>>, vector<1x128xf32>,
    return
  }
  func.func @transform_0(%arg0: i32) -> i32 {
    %c0_i32 = arith.constant 0 : i32
    %c0_i32_0 = arith.constant 0 : i32
    return %c0_i32 : i32
  }
  func.func @transform_1(%arg0: i32) -> i32 {
    %c0_i32 = arith.constant 0 : i32
    %c0_i32_0 = arith.constant 0 : i32
    return %c0_i32 : i32
  }
  func.func @transform_2(%arg0: i32) -> (i32, i32, i32) {
    %c0_i32 = arith.constant 0 : i32
    %c0_i32_0 = arith.constant 0 : i32
    %c0_i32_1 = arith.constant 0 : i32
    return %c0_i32, %arg0, %c0_i32_0 : i32, i32, i32
  }
  func.func @transform_3(%arg0: i32) -> (i32, i32) {
    %c0_i32 = arith.constant 0 : i32
    %c0_i32_0 = arith.constant 0 : i32
    return %arg0, %c0_i32 : i32, i32
  }
}

</mosaic_0001>

<llo_original>
// kernel: tpu_custom_call.1
$region0: #{tpu_custom_call.1}
  #allocation0 [shape = 'u32[]', space=smem, size = 0x4, offset = 0x4, fixed_abs, tag = 'smem constant byte address 0x4 - core index']
  #allocation1 [shape = 'u32[72,128]{1,0:T(1,128)}', space=vmem, size = 0x9000, scoped, tag = 'internal scratch']
  #allocation2 [shape = 'f32[1]{0:T(128)S(6)}', space=smem, size = 0x200, scoped, tag = 'scoped memory for tpu_custom_call.1']
  %s0 = inlined_call_operand.hbm [shape: f32[2], index: 0, kind: input, shape index: {}]
  %s1 = inlined_call_operand.<no memory space> [shape: f32[1], index: 1, kind: input, shape index: {}]
  %s2 = inlined_call_operand.vmem [shape: f32[2,1,128], index: 2, kind: input, shape index: {}]
  %s3 = inlined_call_operand.hbm [shape: f32[1,128], index: 3, kind: output, shape index: {}]
  %s4 = sld [smem:[#allocation0]]
  $region26: #{tpu_custom_call.1} parent=0
    _
  %s6 = ssub.s32 1, %s4
  %s7 = scalar_select 0, %s6, %s4
  %8 = sst [smem:[#allocation2]] %s1
  $region1: #{tpu_custom_call.1} parent=0
    #allocation3 [shape = 'u8[512]{0}', space=smem, size = 0x200, scoped, tag = 'input window, operand 0, single buffered']
    #allocation4 [shape = 's32[1]{0}', space=sflag, size = 0x4, scoped, tag = 'scoped memory for tpu_custom_call.1']
    #allocation5 [shape = 's32[1]{0}', space=sflag, size = 0x4, scoped, tag = 'scoped memory for tpu_custom_call.1']
    #allocation6 [shape = 'u8[512]{0}', space=vmem, size = 0x400, scoped, tag = 'output window, operand 0, single buffered']
    %9 = vsyncpa [#allocation5], 0
    %10 = vsyncpa [#allocation4], 0
    // Predicated region
    $region2: #{tpu_custom_call.1} parent=1 // pred_check
      _
    $region3: #{tpu_custom_call.1} parent=1 // pred_check_branch
      %12 = sbr.rel (0) target = $region5
    $region4: #{tpu_custom_call.1} parent=1 // pred_region
      %14 = vsyncadd [#allocation5], 0
      %s16 = sshll.u32 %s0, 4
      %s17 = int_to_ptr.hbm [resolvable:$true] %s16
      %19 = dma.hbm_to_smem %s17, 16, [#allocation3], [#allocation5]
    $region5: #{tpu_custom_call.1} parent=1 // pred_fallthru
      _
    // Predicated region
    $region6: #{tpu_custom_call.1} parent=1 // pred_check
      _
    $region7: #{tpu_custom_call.1} parent=1 // pred_check_branch
      %21 = sbr.rel (0) target = $region9
    $region8: #{tpu_custom_call.1} parent=1 // pred_region
      _
    $region9: #{tpu_custom_call.1} parent=1 // pred_fallthru
      _
    // Predicated region
    $region10: #{tpu_custom_call.1} parent=1 // pred_check
      _
    $region11: #{tpu_custom_call.1} parent=1 // pred_check_branch
      %23 = sbr.rel (0) target = $region13
    $region12: #{tpu_custom_call.1} parent=1 // pred_region
      _
    $region13: #{tpu_custom_call.1} parent=1 // pred_fallthru
      _
    // Predicated region
    $region14: #{tpu_custom_call.1} parent=1 // pred_check
      _
    $region15: #{tpu_custom_call.1} parent=1 // pred_check_branch
      %25 = sbr.rel (0) target = $region17
    $region16: #{tpu_custom_call.1} parent=1 // pred_region
      %27 = dma.done [#allocation5], 16
    $region17: #{tpu_custom_call.1} parent=1 // pred_fallthru
      _
    %28 = sfence
    %s29 = sld [smem:[#allocation3]]
    %s30 = sld [smem:[#allocation3 + $0x1]]
    %s31 = sld [smem:[#allocation2]]
    %v32 = vld [vmem:[%s2] sm:$0x1]
    %v33 = vstv %s29
    %v34 = vmul.f32 %v33, %v32
    %s35 = scalar_lea.vmem %s2, 1
    %v36 = vld [vmem:[%s35] sm:$0x1]
    %v37 = vstv %s30
    %v38 = vmul.f32 %v37, %v36
    %v39 = vadd.f32 %v34, %v38
    %v40 = vstv %s31
    %v41 = vadd.f32 %v39, %v40
    %v42 = vmul.f32 %v41, 0.5
    %v43 = vtanh.pop %v42
    %v44 = vadd.f32 %v43, 1.0
    %v45 = vmul.f32 %v44, 0.5
    %46 = vst [vmem:[#allocation6] sm:$0x1] %v45
    // Predicated region
    $region18: #{tpu_custom_call.1} parent=1 // pred_check
      _
    $region19: #{tpu_custom_call.1} parent=1 // pred_check_branch
      %48 = sbr.rel (0) target = $region21
    $region20: #{tpu_custom_call.1} parent=1 // pred_region
      %50 = vsyncadd [#allocation4], 0
      %s52 = sshll.u32 [#allocation6], 4
      %s53 = int_to_ptr.vmem [resolvable:$true] %s52
      %s54 = sshll.u32 %s3, 4
      %s55 = int_to_ptr.hbm [resolvable:$true] %s54
      %57 = dma.vmem_to_hbm [thread:$0]  %s53, 16, %s55, [#allocation4]
    $region21: #{tpu_custom_call.1} parent=1 // pred_fallthru
      _
    // Predicated region
    $region22: #{tpu_custom_call.1} parent=1 // pred_check
      _
    $region23: #{tpu_custom_call.1} parent=1 // pred_check_branch
      %59 = sbr.rel (0) target = $region25
    $region24: #{tpu_custom_call.1} parent=1 // pred_region
      %61 = dma.done [#allocation4], 16
    $region25: #{tpu_custom_call.1} parent=1 // pred_fallthru
      _
    %62 = vsyncpa [#allocation4], 1
    %63 = vsyncpa [#allocation5], 1

</llo_original>
